<compile_context>
chip_gen: v7x
topology: tpu7x:2x2x1
jax: 0.10.0
libtpu: 0.0.40
codegen_flags: <defaults>
</compile_context>

<pallas_src>
import jax
import jax.numpy as jnp
from jax.experimental import pallas as pl
from jax.experimental.pallas import tpu as pltpu


# ---------------------------------------------------------------------------
# Backward Pallas kernel: o = neg_lambda * g   (neg_lambda read from SMEM)
# ---------------------------------------------------------------------------
def _neg_scale_kernel(lam_ref, g_ref, o_ref):
    neg_lam = lam_ref[0]  # -lambda, f32 scalar, one cheap SMEM read
    # f32 multiply then cast back: exact for f32, one rounding for bf16.
    o_ref[...] = (g_ref[...].astype(jnp.float32) * neg_lam).astype(o_ref.dtype)


def _round_up(x, m):
    return ((x + m - 1) // m) * m


def _target_block_bytes():
    """Per-generation block-size target (bytes of one input block)."""
    try:
        kind = jax.devices()[0].device_kind.lower()
    except Exception:
        kind = ""
    if "v6" in kind or "v7" in kind:
        # 4 MiB block * (2 in + 2 out double-buffers) = 16 MiB, under the
        # 32 MiB scoped-VMEM default on v6e/v7x.
        return 4 * 1024 * 1024
    # v5e (16 MiB scoped default) and anything unknown: stay at 2 MiB blocks.
    return 2 * 1024 * 1024


def _neg_scale_pallas(g, neg_lam):
    """out = neg_lam * g, streamed lane-dense through VMEM, in place in HBM.

    Requires g.size % 128 == 0 (caller guarantees; otherwise the plain-JAX
    fast path is used).  `neg_lam` is a traced f32 scalar (= -lambda).
    """
    orig_shape = g.shape
    dtype = g.dtype
    n = g.size

    # Lane-dense 2D view with NO padding: largest lane width dividing n.
    lane = next(l for l in (2048, 1024, 512, 256, 128) if n % l == 0)
    rows = n // lane

    sub = 16 if dtype == jnp.bfloat16 else 8
    itemsize = jnp.dtype(dtype).itemsize

    target_tile_r = max(sub, (_target_block_bytes() // (lane * itemsize)) // sub * sub)
    # Force >=2 grid steps (when rows allow) so ("parallel",) can use both
    # v7x TensorCores; harmless on single-TC v5e/v6e.
    half_rows = _round_up(-(-rows // 2), sub)
    tile_r = max(sub, min(target_tile_r, half_rows, _round_up(rows, sub)))

    grid = (pl.cdiv(rows, tile_r),)  # ragged tail block handled by Pallas masking

    g2d = g.reshape(rows, lane)                      # contiguous view, no HBM pass
    lam_arr = jnp.reshape(neg_lam, (1,)).astype(jnp.float32)

    out2d = pl.pallas_call(
        _neg_scale_kernel,
        out_shape=jax.ShapeDtypeStruct((rows, lane), dtype),
        grid=grid,
        in_specs=[
            pl.BlockSpec(memory_space=pltpu.MemorySpace.SMEM),   # -lambda scalar
            pl.BlockSpec((tile_r, lane), lambda i: (i, 0)),      # gradient tile
        ],
        out_specs=pl.BlockSpec((tile_r, lane), lambda i: (i, 0)),
        input_output_aliases={1: 0},                 # in-place: no 2nd HBM buffer
        compiler_params=pltpu.CompilerParams(
            dimension_semantics=("parallel",),
        ),
    )(lam_arr, g2d)

    return out2d.reshape(orig_shape)


_SMALL_BYTES = 256 * 1024  # below this, XLA fusion of -lam*g beats a pallas_call


def _neg_scale(g, neg_lam):
    """grad_input = neg_lam * grad_output with a small-size / odd-size fast path."""
    n = g.size
    if n == 0:
        return g
    itemsize = jnp.dtype(g.dtype).itemsize
    if n * itemsize < _SMALL_BYTES or n % 128 != 0:
        # Tiny or oddly-sized cotangent: let XLA fuse the scalar multiply.
        return (g.astype(jnp.float32) * neg_lam).astype(g.dtype)
    return _neg_scale_pallas(g, neg_lam)


# ---------------------------------------------------------------------------
# GRL: custom_vjp reproducing GradReverse.apply semantics
# ---------------------------------------------------------------------------
@jax.custom_vjp
def _grl_apply(x, lam):
    # Forward is identity (view_as): no kernel, no HBM traffic.
    return x


def _grl_fwd(x, lam):
    return x, lam                     # ctx.save_for_backward(lambda_)


def _grl_bwd(lam, g):
    dx = _neg_scale(g, -lam)          # -lambda * grad_output (Pallas when large)
    return dx, jnp.zeros_like(lam)    # no gradient w.r.t. lambda (matches None)


_grl_apply.defvjp(_grl_fwd, _grl_bwd)


def grl_apply(x, lambd):
    """Functional GRL: identity forward, -lambda * g backward.

    `lambd` may be a Python float or a traced f32 scalar (lambda schedules do
    not recompile the Pallas kernel: lambda is read from SMEM at runtime).
    """
    lam = jnp.asarray(lambd, dtype=jnp.float32)
    return _grl_apply(x, lam)


class GRL:
    """JAX/Pallas equivalent of the PyTorch GRL module."""

    def __init__(self, lambd=0.1):
        self.lambd = float(lambd)

    def __call__(self, x):
        return grl_apply(x, self.lambd)


# ---------------------------------------------------------------------------
# Demo
# ---------------------------------------------------------------------------
if __name__ == "__main__":
    key = jax.random.PRNGKey(0)
    k1, k2, k3 = jax.random.split(key, 3)

    grl = GRL(lambd=0.1)

    # 1) Small NCHW input: forward identity; backward uses the fused fast path.
    x = jax.random.normal(k1, (2, 4, 16, 16), dtype=jnp.float32)
    y = jax.block_until_ready(grl(x))
    assert y.shape == x.shape and y.dtype == x.dtype
    assert bool(jnp.allclose(y, x))

    gx = jax.block_until_ready(jax.grad(lambda z: jnp.sum(grl(z) * 2.0))(x))
    assert gx.shape == x.shape and gx.dtype == x.dtype
    assert bool(jnp.allclose(gx, jnp.full_like(x, -0.1 * 2.0), atol=1e-6))

    # 2) (batch, seq, hidden) cotangent large enough to take the Pallas path.
    x2 = jax.random.normal(k2, (2, 256, 512), dtype=jnp.float32)
    g2 = jax.block_until_ready(jax.grad(lambda z: jnp.sum(grl(z) * 3.0))(x2))
    assert g2.shape == x2.shape and g2.dtype == x2.dtype
    assert bool(jnp.allclose(g2, jnp.full_like(x2, -0.1 * 3.0), atol=1e-6))

    # 3) Exercise the Pallas kernel directly against a dense random reference.
    gref = jax.random.normal(k3, (2, 256, 512), dtype=jnp.float32)
    out = jax.block_until_ready(_neg_scale_pallas(gref, jnp.float32(-0.25)))
    assert bool(jnp.allclose(out, -0.25 * gref, atol=1e-6, rtol=1e-6))

    print("KERNEL_OK")
</pallas_src>

<mosaic_0001>
module attributes {stable_mosaic.version = 11 : i64} {
  func.func @_neg_scale_kernel(%arg0: i32, %arg1: memref<1xf32, #tpu.memory_space<smem>>, %arg2: memref<64x2048xf32, #tpu.memory_space<vmem>>, %arg3: memref<64x2048xf32, #tpu.memory_space<vmem>>) attributes {dimension_semantics = [#tpu.dimension_semantics<parallel>], iteration_bounds = array<i64: 2>, scalar_prefetch = 0 : i64, scratch_operands = 0 : i64, tpu.core_type = #tpu.core_type<tc>, window_params = [{transform_indices = @transform_0, window_bounds = array<i64: 1>}, {transform_indices = @transform_1, window_bounds = array<i64: 64, 2048>}, {transform_indices = @transform_2, window_bounds = array<i64: 64, 2048>}]} {
    %c0 = arith.constant 0 : index
    %0 = memref.load %arg1[%c0] : memref<1xf32, #tpu.memory_space<smem>>
    %c0_0 = arith.constant 0 : index
    %c0_1 = arith.constant 0 : index
    %1 = vector.load %arg2[%c0_0, %c0_1] : memref<64x2048xf32, #tpu.memory_space<vmem>>, vector<64x2048xf32>
    %2 = vector.broadcast %0 : f32 to vector<64x2048xf32>
    %3 = arith.mulf %1, %2 : vector<64x2048xf32>
    %c0_2 = arith.constant 0 : index
    %c0_3 = arith.constant 0 : index
    %4 = vector.load %arg3[%c0_2, %c0_3] : memref<64x2048xf32, #tpu.memory_space<vmem>>, vector<64x2048xf32>
    tpu.vector_store %arg3[%c0_2, %c0_3], %3 {strides = array<i32>} : memref<64x2048xf32, #tpu.memory_space<vmem>>, vector<64x2048xf32>,
    return
  }
  func.func @transform_0(%arg0: i32) -> i32 {
    %c0_i32 = arith.constant 0 : i32
    %c0_i32_0 = arith.constant 0 : i32
    return %c0_i32 : i32
  }
  func.func @transform_1(%arg0: i32) -> (i32, i32) {
    %c0_i32 = arith.constant 0 : i32
    %c0_i32_0 = arith.constant 0 : i32
    return %arg0, %c0_i32 : i32, i32
  }
  func.func @transform_2(%arg0: i32) -> (i32, i32) {
    %c0_i32 = arith.constant 0 : i32
    %c0_i32_0 = arith.constant 0 : i32
    return %arg0, %c0_i32 : i32, i32
  }
}

</mosaic_0001>

<llo_original>
// kernel: tpu_custom_call.1
$region0: #{tpu_custom_call.1}
  #allocation0 [shape = 'u32[]', space=smem, size = 0x4, offset = 0x4, fixed_abs, tag = 'smem constant byte address 0x4 - core index']
  #allocation1 [shape = 'u32[144,128]{1,0:T(1,128)}', space=vmem, size = 0x12000, scoped, tag = 'internal scratch']
  #allocation2 [shape = 'f32[1]{0:T(128)S(6)}', space=smem, size = 0x200, scoped, tag = 'scoped memory for tpu_custom_call.1']
  %s0 = inlined_call_operand.<no memory space> [shape: f32[1], index: 0, kind: input, shape index: {}]
  %s1 = inlined_call_operand.hbm [shape: f32[128,2048], index: 1, kind: input, shape index: {}, may-alias: {1,2}]
  %s2 = inlined_call_operand.hbm [shape: f32[128,2048], index: 2, kind: output, shape index: {}, may-alias: {1,2}]
  %s3 = sld [smem:[#allocation0]]
  $region45: #{tpu_custom_call.1} parent=0
    _
  %s5 = ssub.s32 1, %s3
  %s6 = scalar_select 0, %s5, %s3
  %7 = sst [smem:[#allocation2]] %s0
  $region1: #{tpu_custom_call.1} parent=0
    #allocation3 [shape = 'u8[1048576]{0}', space=vmem, size = 0x100000, scoped, tag = 'input window, operand 1']
    #allocation4 [shape = 's32[2]{0}', space=sflag, size = 0x8, scoped, tag = 'scoped memory for tpu_custom_call.1']
    #allocation5 [shape = 's32[2]{0}', space=sflag, size = 0x8, scoped, tag = 'scoped memory for tpu_custom_call.1']
    #allocation6 [shape = 'u8[1048576]{0}', space=vmem, size = 0x100000, scoped, tag = 'output window, operand 0']
    %8 = vsyncpa [#allocation4], 0
    %s9 = scalar_lea.sflag [#allocation4], 1
    %10 = vsyncpa %s9, 0
    %11 = vsyncpa [#allocation5], 0
    %s12 = scalar_lea.sflag [#allocation5], 1
    %13 = vsyncpa %s12, 0
    loop: start=0, step=1, limit=4
    $region2: #{tpu_custom_call.1} parent=1 // loop_pre_header
      _
    $region3: #{tpu_custom_call.1} parent=1 // loop_header
      %s15 = sphi 0, %s19
      %p16 = scmp.ge.s32.totalorder %s15, 4
      %s23 = sphi 0, %s23
      %s25 = sphi 0, %s23
      %s26 = sphi 0, %s25
      %s40 = sphi 0, %s26
      %s46 = sphi 0, %s48
      %s49 = sphi 0, %s46
      %s50 = sphi 0, %s49
      %s66 = sphi 0, %s50
      %s72 = sphi 0, %s74
      %s75 = sphi 0, %s72
      %s76 = sphi 0, %s75
      %s92 = sphi 0, %s76
    $region4: #{tpu_custom_call.1} parent=1 // loop_header_branch
      %18 = sbr.rel (%p16) target = $region8
    $region5: #{tpu_custom_call.1} parent=1 // loop_body
      %s20 = ssub.s32 %s15, 1
      %s21 = ssub.s32 %s15, 2
      %s22 = sadd.s32 %s15, 1
      %s24 = sadd.s32 %s23, 1
      %p27 = scmp.eq.s32.totalorder %s15, 1
      %p28 = scmp.ne.s32.totalorder %s23, %s25
      %p29 = scmp.eq.s32.totalorder %s15, 0
      %p30 = por %p28, %p29
      %p31 = scmp.ne.s32.totalorder %s23, %s25
      %p32 = scmp.eq.s32.totalorder %s20, 1
      %p33 = por %p31, %p32
      %p34 = scmp.ne.s32.totalorder %s25, %s26
      %p35 = scmp.eq.s32.totalorder %s20, 0
      %p36 = por %p34, %p35
      %p37 = scmp.ne.s32.totalorder %s25, %s26
      %p38 = scmp.eq.s32.totalorder %s21, 1
      %p39 = por %p37, %p38
      %p41 = scmp.ne.s32.totalorder %s26, %s40
      %p42 = scmp.eq.s32.totalorder %s21, 0
      %p43 = por %p41, %p42
      %s44 = ssub.s32 %s15, %s22
      %p45 = scmp.eq.s32.totalorder %s44, 0
      %s47 = sadd.s32 %s46, 1
      %s48 = scalar_select %p45, %s46, %s47
      %p51 = pneg %p45
      %p52 = scmp.eq.s32.totalorder %s15, 1
      %p53 = por %p51, %p52
      %p54 = scmp.ne.s32.totalorder %s46, %s49
      %p55 = scmp.eq.s32.totalorder %s15, 0
      %p56 = por %p54, %p55
      %p57 = scmp.ne.s32.totalorder %s46, %s49
      %p58 = scmp.eq.s32.totalorder %s20, 1
      %p59 = por %p57, %p58
      %p60 = scmp.ne.s32.totalorder %s49, %s50
      %p61 = scmp.eq.s32.totalorder %s20, 0
      %p62 = por %p60, %p61
      %p63 = scmp.ne.s32.totalorder %s49, %s50
      %p64 = scmp.eq.s32.totalorder %s21, 1
      %p65 = por %p63, %p64
      %p67 = scmp.ne.s32.totalorder %s50, %s66
      %p68 = scmp.eq.s32.totalorder %s21, 0
      %p69 = por %p67, %p68
      %s70 = ssub.s32 %s15, %s22
      %p71 = scmp.eq.s32.totalorder %s70, 0
      %s73 = sadd.s32 %s72, 1
      %s74 = scalar_select %p71, %s72, %s73
      %p77 = pneg %p71
      %p78 = scmp.eq.s32.totalorder %s15, 1
      %p79 = por %p77, %p78
      %p80 = scmp.ne.s32.totalorder %s72, %s75
      %p81 = scmp.eq.s32.totalorder %s15, 0
      %p82 = por %p80, %p81
      %p83 = scmp.ne.s32.totalorder %s72, %s75
      %p84 = scmp.eq.s32.totalorder %s20, 1
      %p85 = por %p83, %p84
      %p86 = scmp.ne.s32.totalorder %s75, %s76
      %p87 = scmp.eq.s32.totalorder %s20, 0
      %p88 = por %p86, %p87
      %p89 = scmp.ne.s32.totalorder %s75, %s76
      %p90 = scmp.eq.s32.totalorder %s21, 1
      %p91 = por %p89, %p90
      %p93 = scmp.ne.s32.totalorder %s76, %s92
      %p94 = scmp.eq.s32.totalorder %s21, 0
      %p95 = por %p93, %p94
      %p96 = scmp.le.s32.totalorder 1, %s15
      %p97 = scmp.lt.s32.totalorder %s15, 3
      %p98 = pnand %p96, %p97
      %p99 = pneg %p98
      // Predicated region
      $region9: #{tpu_custom_call.1} parent=5 // pred_check
        _
      $region10: #{tpu_custom_call.1} parent=5 // pred_check_branch
        %101 = sbr.rel (%p98) target = $region12
      $region11: #{tpu_custom_call.1} parent=5 // pred_region
        %s102 = ssub.s32 %s15, 1
        // Predicated region
        $region13: #{tpu_custom_call.1} parent=11 // pred_check
          %p103 = pneg %p36
        $region14: #{tpu_custom_call.1} parent=11 // pred_check_branch
          %105 = sbr.rel (%p103) target = $region16
        $region15: #{tpu_custom_call.1} parent=11 // pred_region
          _
        $region16: #{tpu_custom_call.1} parent=11 // pred_fallthru
          _
      $region12: #{tpu_custom_call.1} parent=5 // pred_fallthru
        _
      %p106 = scmp.lt.s32.totalorder %s15, 2
      // Predicated region
      $region17: #{tpu_custom_call.1} parent=5 // pred_check
        %p107 = pneg %p106
      $region18: #{tpu_custom_call.1} parent=5 // pred_check_branch
        %109 = sbr.rel (%p107) target = $region20
      $region19: #{tpu_custom_call.1} parent=5 // pred_region
        // Predicated region
        $region21: #{tpu_custom_call.1} parent=19 // pred_check
          %p110 = pneg %p56
        $region22: #{tpu_custom_call.1} parent=19 // pred_check_branch
          %112 = sbr.rel (%p110) target = $region24
        $region23: #{tpu_custom_call.1} parent=19 // pred_region
          %s113 = sand.u32 %s46, 1
          %s114 = scalar_lea.sflag [#allocation4], %s113
          %s115 = sand.u32 %s46, 1
          %s116 = smul.addr %s115, 1024
          %s117 = scalar_lea.vmem [#allocation3], %s116
          %s118 = smul.u32 8, %s15
          %s120 = ssub.s32 16384, 16384
          %121 = vsyncadd %s114, %s120
          %s122 = smul.addr %s118, 16
          %s123 = smul.addr %s122, 128
          %s124 = scalar_lea.hbm %s1, %s123
          %s125 = sshll.u32 %s117, 4
          %s126 = int_to_ptr.vmem [resolvable:$true] %s125
          %131 = dma.hbm_to_vmem [thread:$0]  %s124, 16384, %s126, %s114, 2048, 2048, 128
        $region24: #{tpu_custom_call.1} parent=19 // pred_fallthru
          _
      $region20: #{tpu_custom_call.1} parent=5 // pred_fallthru
        _
      %p132 = scmp.le.s32.totalorder 1, %s15
      %p133 = scmp.lt.s32.totalorder %s15, 3
      %p134 = pnand %p132, %p133
      %p135 = pneg %p134
      // Predicated region
      $region25: #{tpu_custom_call.1} parent=5 // pred_check
        _
      $region26: #{tpu_custom_call.1} parent=5 // pred_check_branch
        %137 = sbr.rel (%p134) target = $region28
      $region27: #{tpu_custom_call.1} parent=5 // pred_region
        %s138 = ssub.s32 %s15, 1
        %s139 = sand.u32 %s49, 1
        %s140 = scalar_lea.sflag [#allocation4], %s139
        %s141 = sand.u32 %s49, 1
        %s142 = smul.addr %s141, 1024
        %s143 = scalar_lea.vmem [#allocation3], %s142
        // Predicated region
        $region29: #{tpu_custom_call.1} parent=27 // pred_check
          %p144 = pneg %p62
        $region30: #{tpu_custom_call.1} parent=27 // pred_check_branch
          %146 = sbr.rel (%p144) target = $region32
        $region31: #{tpu_custom_call.1} parent=27 // pred_region
          %147 = dma.done %s140, 16384
        $region32: #{tpu_custom_call.1} parent=27 // pred_fallthru
          _
        %p148 = pneg %p36
        %p149 = pneg %p33
        %s150 = sand.u32 %s49, 1
        %s151 = scalar_lea.sflag [#allocation4], %s150
        %s152 = sand.u32 %s49, 1
        %s153 = smul.addr %s152, 1024
        %s154 = scalar_lea.vmem [#allocation3], %s153
        %p155 = pneg %p62
        %p156 = pneg %p59
        %p157 = pneg %p88
        %p158 = pneg %p85
        %s159 = sand.u32 %s75, 1
        %s160 = scalar_lea.sflag [#allocation5], %s159
        %s161 = sand.u32 %s75, 1
        %s162 = smul.addr %s161, 1024
        %s163 = scalar_lea.vmem [#allocation6], %s162
        %s164 = smul.u32 8, %s20
        %s165 = smul.u32 8, %s20
        %s166 = sld [smem:[#allocation2]]
        %v167 = vld [vmem:[%s143] sm:$0xff]
        %v168 = vld [vmem:[%s143 + $0x8] sm:$0xff]
        %v169 = vld [vmem:[%s143 + $0x10] sm:$0xff]
        %v170 = vld [vmem:[%s143 + $0x18] sm:$0xff]
        %v171 = vld [vmem:[%s143 + $0x20] sm:$0xff]
        %v172 = vld [vmem:[%s143 + $0x28] sm:$0xff]
        %v173 = vld [vmem:[%s143 + $0x30] sm:$0xff]
        %v174 = vld [vmem:[%s143 + $0x38] sm:$0xff]
        %v175 = vld [vmem:[%s143 + $0x40] sm:$0xff]
        %v176 = vld [vmem:[%s143 + $0x48] sm:$0xff]
        %v177 = vld [vmem:[%s143 + $0x50] sm:$0xff]
        %v178 = vld [vmem:[%s143 + $0x58] sm:$0xff]
        %v179 = vld [vmem:[%s143 + $0x60] sm:$0xff]
        %v180 = vld [vmem:[%s143 + $0x68] sm:$0xff]
        %v181 = vld [vmem:[%s143 + $0x70] sm:$0xff]
        %v182 = vld [vmem:[%s143 + $0x78] sm:$0xff]
        %v183 = vld [vmem:[%s143 + $0x80] sm:$0xff]
        %v184 = vld [vmem:[%s143 + $0x88] sm:$0xff]
        %v185 = vld [vmem:[%s143 + $0x90] sm:$0xff]
        %v186 = vld [vmem:[%s143 + $0x98] sm:$0xff]
        %v187 = vld [vmem:[%s143 + $0xa0] sm:$0xff]
        %v188 = vld [vmem:[%s143 + $0xa8] sm:$0xff]
        %v189 = vld [vmem:[%s143 + $0xb0] sm:$0xff]
        %v190 = vld [vmem:[%s143 + $0xb8] sm:$0xff]
        %v191 = vld [vmem:[%s143 + $0xc0] sm:$0xff]
        %v192 = vld [vmem:[%s143 + $0xc8] sm:$0xff]
        %v193 = vld [vmem:[%s143 + $0xd0] sm:$0xff]
        %v194 = vld [vmem:[%s143 + $0xd8] sm:$0xff]
        %v195 = vld [vmem:[%s143 + $0xe0] sm:$0xff]
        %v196 = vld [vmem:[%s143 + $0xe8] sm:$0xff]
        %v197 = vld [vmem:[%s143 + $0xf0] sm:$0xff]
        %v198 = vld [vmem:[%s143 + $0xf8] sm:$0xff]
        %v199 = vld [vmem:[%s143 + $0x100] sm:$0xff]
        %v200 = vld [vmem:[%s143 + $0x108] sm:$0xff]
        %v201 = vld [vmem:[%s143 + $0x110] sm:$0xff]
        %v202 = vld [vmem:[%s143 + $0x118] sm:$0xff]
        %v203 = vld [vmem:[%s143 + $0x120] sm:$0xff]
        %v204 = vld [vmem:[%s143 + $0x128] sm:$0xff]
        %v205 = vld [vmem:[%s143 + $0x130] sm:$0xff]
        %v206 = vld [vmem:[%s143 + $0x138] sm:$0xff]
        %v207 = vld [vmem:[%s143 + $0x140] sm:$0xff]
        %v208 = vld [vmem:[%s143 + $0x148] sm:$0xff]
        %v209 = vld [vmem:[%s143 + $0x150] sm:$0xff]
        %v210 = vld [vmem:[%s143 + $0x158] sm:$0xff]
        %v211 = vld [vmem:[%s143 + $0x160] sm:$0xff]
        %v212 = vld [vmem:[%s143 + $0x168] sm:$0xff]
        %v213 = vld [vmem:[%s143 + $0x170] sm:$0xff]
        %v214 = vld [vmem:[%s143 + $0x178] sm:$0xff]
        %v215 = vld [vmem:[%s143 + $0x180] sm:$0xff]
        %v216 = vld [vmem:[%s143 + $0x188] sm:$0xff]
        %v217 = vld [vmem:[%s143 + $0x190] sm:$0xff]
        %v218 = vld [vmem:[%s143 + $0x198] sm:$0xff]
        %v219 = vld [vmem:[%s143 + $0x1a0] sm:$0xff]
        %v220 = vld [vmem:[%s143 + $0x1a8] sm:$0xff]
        %v221 = vld [vmem:[%s143 + $0x1b0] sm:$0xff]
        %v222 = vld [vmem:[%s143 + $0x1b8] sm:$0xff]
        %v223 = vld [vmem:[%s143 + $0x1c0] sm:$0xff]
        %v224 = vld [vmem:[%s143 + $0x1c8] sm:$0xff]
        %v225 = vld [vmem:[%s143 + $0x1d0] sm:$0xff]
        %v226 = vld [vmem:[%s143 + $0x1d8] sm:$0xff]
        %v227 = vld [vmem:[%s143 + $0x1e0] sm:$0xff]
        %v228 = vld [vmem:[%s143 + $0x1e8] sm:$0xff]
        %v229 = vld [vmem:[%s143 + $0x1f0] sm:$0xff]
        %v230 = vld [vmem:[%s143 + $0x1f8] sm:$0xff]
        %v231 = vld [vmem:[%s143 + $0x200] sm:$0xff]
        %v232 = vld [vmem:[%s143 + $0x208] sm:$0xff]
        %v233 = vld [vmem:[%s143 + $0x210] sm:$0xff]
        %v234 = vld [vmem:[%s143 + $0x218] sm:$0xff]
        %v235 = vld [vmem:[%s143 + $0x220] sm:$0xff]
        %v236 = vld [vmem:[%s143 + $0x228] sm:$0xff]
        %v237 = vld [vmem:[%s143 + $0x230] sm:$0xff]
        %v238 = vld [vmem:[%s143 + $0x238] sm:$0xff]
        %v239 = vld [vmem:[%s143 + $0x240] sm:$0xff]
        %v240 = vld [vmem:[%s143 + $0x248] sm:$0xff]
        %v241 = vld [vmem:[%s143 + $0x250] sm:$0xff]
        %v242 = vld [vmem:[%s143 + $0x258] sm:$0xff]
        %v243 = vld [vmem:[%s143 + $0x260] sm:$0xff]
        %v244 = vld [vmem:[%s143 + $0x268] sm:$0xff]
        %v245 = vld [vmem:[%s143 + $0x270] sm:$0xff]
        %v246 = vld [vmem:[%s143 + $0x278] sm:$0xff]
        %v247 = vld [vmem:[%s143 + $0x280] sm:$0xff]
        %v248 = vld [vmem:[%s143 + $0x288] sm:$0xff]
        %v249 = vld [vmem:[%s143 + $0x290] sm:$0xff]
        %v250 = vld [vmem:[%s143 + $0x298] sm:$0xff]
        %v251 = vld [vmem:[%s143 + $0x2a0] sm:$0xff]
        %v252 = vld [vmem:[%s143 + $0x2a8] sm:$0xff]
        %v253 = vld [vmem:[%s143 + $0x2b0] sm:$0xff]
        %v254 = vld [vmem:[%s143 + $0x2b8] sm:$0xff]
        %v255 = vld [vmem:[%s143 + $0x2c0] sm:$0xff]
        %v256 = vld [vmem:[%s143 + $0x2c8] sm:$0xff]
        %v257 = vld [vmem:[%s143 + $0x2d0] sm:$0xff]
        %v258 = vld [vmem:[%s143 + $0x2d8] sm:$0xff]
        %v259 = vld [vmem:[%s143 + $0x2e0] sm:$0xff]
        %v260 = vld [vmem:[%s143 + $0x2e8] sm:$0xff]
        %v261 = vld [vmem:[%s143 + $0x2f0] sm:$0xff]
        %v262 = vld [vmem:[%s143 + $0x2f8] sm:$0xff]
        %v263 = vld [vmem:[%s143 + $0x300] sm:$0xff]
        %v264 = vld [vmem:[%s143 + $0x308] sm:$0xff]
        %v265 = vld [vmem:[%s143 + $0x310] sm:$0xff]
        %v266 = vld [vmem:[%s143 + $0x318] sm:$0xff]
        %v267 = vld [vmem:[%s143 + $0x320] sm:$0xff]
        %v268 = vld [vmem:[%s143 + $0x328] sm:$0xff]
        %v269 = vld [vmem:[%s143 + $0x330] sm:$0xff]
        %v270 = vld [vmem:[%s143 + $0x338] sm:$0xff]
        %v271 = vld [vmem:[%s143 + $0x340] sm:$0xff]
        %v272 = vld [vmem:[%s143 + $0x348] sm:$0xff]
        %v273 = vld [vmem:[%s143 + $0x350] sm:$0xff]
        %v274 = vld [vmem:[%s143 + $0x358] sm:$0xff]
        %v275 = vld [vmem:[%s143 + $0x360] sm:$0xff]
        %v276 = vld [vmem:[%s143 + $0x368] sm:$0xff]
        %v277 = vld [vmem:[%s143 + $0x370] sm:$0xff]
        %v278 = vld [vmem:[%s143 + $0x378] sm:$0xff]
        %v279 = vld [vmem:[%s143 + $0x380] sm:$0xff]
        %v280 = vld [vmem:[%s143 + $0x388] sm:$0xff]
        %v281 = vld [vmem:[%s143 + $0x390] sm:$0xff]
        %v282 = vld [vmem:[%s143 + $0x398] sm:$0xff]
        %v283 = vld [vmem:[%s143 + $0x3a0] sm:$0xff]
        %v284 = vld [vmem:[%s143 + $0x3a8] sm:$0xff]
        %v285 = vld [vmem:[%s143 + $0x3b0] sm:$0xff]
        %v286 = vld [vmem:[%s143 + $0x3b8] sm:$0xff]
        %v287 = vld [vmem:[%s143 + $0x3c0] sm:$0xff]
        %v288 = vld [vmem:[%s143 + $0x3c8] sm:$0xff]
        %v289 = vld [vmem:[%s143 + $0x3d0] sm:$0xff]
        %v290 = vld [vmem:[%s143 + $0x3d8] sm:$0xff]
        %v291 = vld [vmem:[%s143 + $0x3e0] sm:$0xff]
        %v292 = vld [vmem:[%s143 + $0x3e8] sm:$0xff]
        %v293 = vld [vmem:[%s143 + $0x3f0] sm:$0xff]
        %v294 = vld [vmem:[%s143 + $0x3f8] sm:$0xff]
        %v295 = vstv %s166
        %v296 = vmul.f32 %v167, %v295
        %v297 = vmul.f32 %v168, %v295
        %v298 = vmul.f32 %v169, %v295
        %v299 = vmul.f32 %v170, %v295
        %v300 = vmul.f32 %v171, %v295
        %v301 = vmul.f32 %v172, %v295
        %v302 = vmul.f32 %v173, %v295
        %v303 = vmul.f32 %v174, %v295
        %v304 = vmul.f32 %v175, %v295
        %v305 = vmul.f32 %v176, %v295
        %v306 = vmul.f32 %v177, %v295
        %v307 = vmul.f32 %v178, %v295
        %v308 = vmul.f32 %v179, %v295
        %v309 = vmul.f32 %v180, %v295
        %v310 = vmul.f32 %v181, %v295
        %v311 = vmul.f32 %v182, %v295
        %v312 = vmul.f32 %v183, %v295
        %v313 = vmul.f32 %v184, %v295
        %v314 = vmul.f32 %v185, %v295
        %v315 = vmul.f32 %v186, %v295
        %v316 = vmul.f32 %v187, %v295
        %v317 = vmul.f32 %v188, %v295
        %v318 = vmul.f32 %v189, %v295
        %v319 = vmul.f32 %v190, %v295
        %v320 = vmul.f32 %v191, %v295
        %v321 = vmul.f32 %v192, %v295
        %v322 = vmul.f32 %v193, %v295
        %v323 = vmul.f32 %v194, %v295
        %v324 = vmul.f32 %v195, %v295
        %v325 = vmul.f32 %v196, %v295
        %v326 = vmul.f32 %v197, %v295
        %v327 = vmul.f32 %v198, %v295
        %v328 = vmul.f32 %v199, %v295
        %v329 = vmul.f32 %v200, %v295
        %v330 = vmul.f32 %v201, %v295
        %v331 = vmul.f32 %v202, %v295
        %v332 = vmul.f32 %v203, %v295
        %v333 = vmul.f32 %v204, %v295
        %v334 = vmul.f32 %v205, %v295
        %v335 = vmul.f32 %v206, %v295
        %v336 = vmul.f32 %v207, %v295
        %v337 = vmul.f32 %v208, %v295
        %v338 = vmul.f32 %v209, %v295
        %v339 = vmul.f32 %v210, %v295
        %v340 = vmul.f32 %v211, %v295
        %v341 = vmul.f32 %v212, %v295
        %v342 = vmul.f32 %v213, %v295
        %v343 = vmul.f32 %v214, %v295
        %v344 = vmul.f32 %v215, %v295
        %v345 = vmul.f32 %v216, %v295
        %v346 = vmul.f32 %v217, %v295
        %v347 = vmul.f32 %v218, %v295
        %v348 = vmul.f32 %v219, %v295
        %v349 = vmul.f32 %v220, %v295
        %v350 = vmul.f32 %v221, %v295
        %v351 = vmul.f32 %v222, %v295
        %v352 = vmul.f32 %v223, %v295
        %v353 = vmul.f32 %v224, %v295
        %v354 = vmul.f32 %v225, %v295
        %v355 = vmul.f32 %v226, %v295
        %v356 = vmul.f32 %v227, %v295
        %v357 = vmul.f32 %v228, %v295
        %v358 = vmul.f32 %v229, %v295
        %v359 = vmul.f32 %v230, %v295
        %v360 = vmul.f32 %v231, %v295
        %v361 = vmul.f32 %v232, %v295
        %v362 = vmul.f32 %v233, %v295
        %v363 = vmul.f32 %v234, %v295
        %v364 = vmul.f32 %v235, %v295
        %v365 = vmul.f32 %v236, %v295
        %v366 = vmul.f32 %v237, %v295
        %v367 = vmul.f32 %v238, %v295
        %v368 = vmul.f32 %v239, %v295
        %v369 = vmul.f32 %v240, %v295
        %v370 = vmul.f32 %v241, %v295
        %v371 = vmul.f32 %v242, %v295
        %v372 = vmul.f32 %v243, %v295
        %v373 = vmul.f32 %v244, %v295
        %v374 = vmul.f32 %v245, %v295
        %v375 = vmul.f32 %v246, %v295
        %v376 = vmul.f32 %v247, %v295
        %v377 = vmul.f32 %v248, %v295
        %v378 = vmul.f32 %v249, %v295
        %v379 = vmul.f32 %v250, %v295
        %v380 = vmul.f32 %v251, %v295
        %v381 = vmul.f32 %v252, %v295
        %v382 = vmul.f32 %v253, %v295
        %v383 = vmul.f32 %v254, %v295
        %v384 = vmul.f32 %v255, %v295
        %v385 = vmul.f32 %v256, %v295
        %v386 = vmul.f32 %v257, %v295
        %v387 = vmul.f32 %v258, %v295
        %v388 = vmul.f32 %v259, %v295
        %v389 = vmul.f32 %v260, %v295
        %v390 = vmul.f32 %v261, %v295
        %v391 = vmul.f32 %v262, %v295
        %v392 = vmul.f32 %v263, %v295
        %v393 = vmul.f32 %v264, %v295
        %v394 = vmul.f32 %v265, %v295
        %v395 = vmul.f32 %v266, %v295
        %v396 = vmul.f32 %v267, %v295
        %v397 = vmul.f32 %v268, %v295
        %v398 = vmul.f32 %v269, %v295
        %v399 = vmul.f32 %v270, %v295
        %v400 = vmul.f32 %v271, %v295
        %v401 = vmul.f32 %v272, %v295
        %v402 = vmul.f32 %v273, %v295
        %v403 = vmul.f32 %v274, %v295
        %v404 = vmul.f32 %v275, %v295
        %v405 = vmul.f32 %v276, %v295
        %v406 = vmul.f32 %v277, %v295
        %v407 = vmul.f32 %v278, %v295
        %v408 = vmul.f32 %v279, %v295
        %v409 = vmul.f32 %v280, %v295
        %v410 = vmul.f32 %v281, %v295
        %v411 = vmul.f32 %v282, %v295
        %v412 = vmul.f32 %v283, %v295
        %v413 = vmul.f32 %v284, %v295
        %v414 = vmul.f32 %v285, %v295
        %v415 = vmul.f32 %v286, %v295
        %v416 = vmul.f32 %v287, %v295
        %v417 = vmul.f32 %v288, %v295
        %v418 = vmul.f32 %v289, %v295
        %v419 = vmul.f32 %v290, %v295
        %v420 = vmul.f32 %v291, %v295
        %v421 = vmul.f32 %v292, %v295
        %v422 = vmul.f32 %v293, %v295
        %v423 = vmul.f32 %v294, %v295
        %424 = vst [vmem:[%s163] sm:$0xff] %v296
        %425 = vst [vmem:[%s163 + $0x8] sm:$0xff] %v297
        %426 = vst [vmem:[%s163 + $0x10] sm:$0xff] %v298
        %427 = vst [vmem:[%s163 + $0x18] sm:$0xff] %v299
        %428 = vst [vmem:[%s163 + $0x20] sm:$0xff] %v300
        %429 = vst [vmem:[%s163 + $0x28] sm:$0xff] %v301
        %430 = vst [vmem:[%s163 + $0x30] sm:$0xff] %v302
        %431 = vst [vmem:[%s163 + $0x38] sm:$0xff] %v303
        %432 = vst [vmem:[%s163 + $0x40] sm:$0xff] %v304
        %433 = vst [vmem:[%s163 + $0x48] sm:$0xff] %v305
        %434 = vst [vmem:[%s163 + $0x50] sm:$0xff] %v306
        %435 = vst [vmem:[%s163 + $0x58] sm:$0xff] %v307
        %436 = vst [vmem:[%s163 + $0x60] sm:$0xff] %v308
        %437 = vst [vmem:[%s163 + $0x68] sm:$0xff] %v309
        %438 = vst [vmem:[%s163 + $0x70] sm:$0xff] %v310
        %439 = vst [vmem:[%s163 + $0x78] sm:$0xff] %v311
        %440 = vst [vmem:[%s163 + $0x80] sm:$0xff] %v312
        %441 = vst [vmem:[%s163 + $0x88] sm:$0xff] %v313
        %442 = vst [vmem:[%s163 + $0x90] sm:$0xff] %v314
        %443 = vst [vmem:[%s163 + $0x98] sm:$0xff] %v315
        %444 = vst [vmem:[%s163 + $0xa0] sm:$0xff] %v316
        %445 = vst [vmem:[%s163 + $0xa8] sm:$0xff] %v317
        %446 = vst [vmem:[%s163 + $0xb0] sm:$0xff] %v318
        %447 = vst [vmem:[%s163 + $0xb8] sm:$0xff] %v319
        %448 = vst [vmem:[%s163 + $0xc0] sm:$0xff] %v320
        %449 = vst [vmem:[%s163 + $0xc8] sm:$0xff] %v321
        %450 = vst [vmem:[%s163 + $0xd0] sm:$0xff] %v322
        %451 = vst [vmem:[%s163 + $0xd8] sm:$0xff] %v323
        %452 = vst [vmem:[%s163 + $0xe0] sm:$0xff] %v324
        %453 = vst [vmem:[%s163 + $0xe8] sm:$0xff] %v325
        %454 = vst [vmem:[%s163 + $0xf0] sm:$0xff] %v326
        %455 = vst [vmem:[%s163 + $0xf8] sm:$0xff] %v327
        %456 = vst [vmem:[%s163 + $0x100] sm:$0xff] %v328
        %457 = vst [vmem:[%s163 + $0x108] sm:$0xff] %v329
        %458 = vst [vmem:[%s163 + $0x110] sm:$0xff] %v330
        %459 = vst [vmem:[%s163 + $0x118] sm:$0xff] %v331
        %460 = vst [vmem:[%s163 + $0x120] sm:$0xff] %v332
        %461 = vst [vmem:[%s163 + $0x128] sm:$0xff] %v333
        %462 = vst [vmem:[%s163 + $0x130] sm:$0xff] %v334
        %463 = vst [vmem:[%s163 + $0x138] sm:$0xff] %v335
        %464 = vst [vmem:[%s163 + $0x140] sm:$0xff] %v336
        %465 = vst [vmem:[%s163 + $0x148] sm:$0xff] %v337
        %466 = vst [vmem:[%s163 + $0x150] sm:$0xff] %v338
        %467 = vst [vmem:[%s163 + $0x158] sm:$0xff] %v339
        %468 = vst [vmem:[%s163 + $0x160] sm:$0xff] %v340
        %469 = vst [vmem:[%s163 + $0x168] sm:$0xff] %v341
        %470 = vst [vmem:[%s163 + $0x170] sm:$0xff] %v342
        %471 = vst [vmem:[%s163 + $0x178] sm:$0xff] %v343
        %472 = vst [vmem:[%s163 + $0x180] sm:$0xff] %v344
        %473 = vst [vmem:[%s163 + $0x188] sm:$0xff] %v345
        %474 = vst [vmem:[%s163 + $0x190] sm:$0xff] %v346
        %475 = vst [vmem:[%s163 + $0x198] sm:$0xff] %v347
        %476 = vst [vmem:[%s163 + $0x1a0] sm:$0xff] %v348
        %477 = vst [vmem:[%s163 + $0x1a8] sm:$0xff] %v349
        %478 = vst [vmem:[%s163 + $0x1b0] sm:$0xff] %v350
        %479 = vst [vmem:[%s163 + $0x1b8] sm:$0xff] %v351
        %480 = vst [vmem:[%s163 + $0x1c0] sm:$0xff] %v352
        %481 = vst [vmem:[%s163 + $0x1c8] sm:$0xff] %v353
        %482 = vst [vmem:[%s163 + $0x1d0] sm:$0xff] %v354
        %483 = vst [vmem:[%s163 + $0x1d8] sm:$0xff] %v355
        %484 = vst [vmem:[%s163 + $0x1e0] sm:$0xff] %v356
        %485 = vst [vmem:[%s163 + $0x1e8] sm:$0xff] %v357
        %486 = vst [vmem:[%s163 + $0x1f0] sm:$0xff] %v358
        %487 = vst [vmem:[%s163 + $0x1f8] sm:$0xff] %v359
        %488 = vst [vmem:[%s163 + $0x200] sm:$0xff] %v360
        %489 = vst [vmem:[%s163 + $0x208] sm:$0xff] %v361
        %490 = vst [vmem:[%s163 + $0x210] sm:$0xff] %v362
        %491 = vst [vmem:[%s163 + $0x218] sm:$0xff] %v363
        %492 = vst [vmem:[%s163 + $0x220] sm:$0xff] %v364
        %493 = vst [vmem:[%s163 + $0x228] sm:$0xff] %v365
        %494 = vst [vmem:[%s163 + $0x230] sm:$0xff] %v366
        %495 = vst [vmem:[%s163 + $0x238] sm:$0xff] %v367
        %496 = vst [vmem:[%s163 + $0x240] sm:$0xff] %v368
        %497 = vst [vmem:[%s163 + $0x248] sm:$0xff] %v369
        %498 = vst [vmem:[%s163 + $0x250] sm:$0xff] %v370
        %499 = vst [vmem:[%s163 + $0x258] sm:$0xff] %v371
        %500 = vst [vmem:[%s163 + $0x260] sm:$0xff] %v372
        %501 = vst [vmem:[%s163 + $0x268] sm:$0xff] %v373
        %502 = vst [vmem:[%s163 + $0x270] sm:$0xff] %v374
        %503 = vst [vmem:[%s163 + $0x278] sm:$0xff] %v375
        %504 = vst [vmem:[%s163 + $0x280] sm:$0xff] %v376
        %505 = vst [vmem:[%s163 + $0x288] sm:$0xff] %v377
        %506 = vst [vmem:[%s163 + $0x290] sm:$0xff] %v378
        %507 = vst [vmem:[%s163 + $0x298] sm:$0xff] %v379
        %508 = vst [vmem:[%s163 + $0x2a0] sm:$0xff] %v380
        %509 = vst [vmem:[%s163 + $0x2a8] sm:$0xff] %v381
        %510 = vst [vmem:[%s163 + $0x2b0] sm:$0xff] %v382
        %511 = vst [vmem:[%s163 + $0x2b8] sm:$0xff] %v383
        %512 = vst [vmem:[%s163 + $0x2c0] sm:$0xff] %v384
        %513 = vst [vmem:[%s163 + $0x2c8] sm:$0xff] %v385
        %514 = vst [vmem:[%s163 + $0x2d0] sm:$0xff] %v386
        %515 = vst [vmem:[%s163 + $0x2d8] sm:$0xff] %v387
        %516 = vst [vmem:[%s163 + $0x2e0] sm:$0xff] %v388
        %517 = vst [vmem:[%s163 + $0x2e8] sm:$0xff] %v389
        %518 = vst [vmem:[%s163 + $0x2f0] sm:$0xff] %v390
        %519 = vst [vmem:[%s163 + $0x2f8] sm:$0xff] %v391
        %520 = vst [vmem:[%s163 + $0x300] sm:$0xff] %v392
        %521 = vst [vmem:[%s163 + $0x308] sm:$0xff] %v393
        %522 = vst [vmem:[%s163 + $0x310] sm:$0xff] %v394
        %523 = vst [vmem:[%s163 + $0x318] sm:$0xff] %v395
        %524 = vst [vmem:[%s163 + $0x320] sm:$0xff] %v396
        %525 = vst [vmem:[%s163 + $0x328] sm:$0xff] %v397
        %526 = vst [vmem:[%s163 + $0x330] sm:$0xff] %v398
        %527 = vst [vmem:[%s163 + $0x338] sm:$0xff] %v399
        %528 = vst [vmem:[%s163 + $0x340] sm:$0xff] %v400
        %529 = vst [vmem:[%s163 + $0x348] sm:$0xff] %v401
        %530 = vst [vmem:[%s163 + $0x350] sm:$0xff] %v402
        %531 = vst [vmem:[%s163 + $0x358] sm:$0xff] %v403
        %532 = vst [vmem:[%s163 + $0x360] sm:$0xff] %v404
        %533 = vst [vmem:[%s163 + $0x368] sm:$0xff] %v405
        %534 = vst [vmem:[%s163 + $0x370] sm:$0xff] %v406
        %535 = vst [vmem:[%s163 + $0x378] sm:$0xff] %v407
        %536 = vst [vmem:[%s163 + $0x380] sm:$0xff] %v408
        %537 = vst [vmem:[%s163 + $0x388] sm:$0xff] %v409
        %538 = vst [vmem:[%s163 + $0x390] sm:$0xff] %v410
        %539 = vst [vmem:[%s163 + $0x398] sm:$0xff] %v411
        %540 = vst [vmem:[%s163 + $0x3a0] sm:$0xff] %v412
        %541 = vst [vmem:[%s163 + $0x3a8] sm:$0xff] %v413
        %542 = vst [vmem:[%s163 + $0x3b0] sm:$0xff] %v414
        %543 = vst [vmem:[%s163 + $0x3b8] sm:$0xff] %v415
        %544 = vst [vmem:[%s163 + $0x3c0] sm:$0xff] %v416
        %545 = vst [vmem:[%s163 + $0x3c8] sm:$0xff] %v417
        %546 = vst [vmem:[%s163 + $0x3d0] sm:$0xff] %v418
        %547 = vst [vmem:[%s163 + $0x3d8] sm:$0xff] %v419
        %548 = vst [vmem:[%s163 + $0x3e0] sm:$0xff] %v420
        %549 = vst [vmem:[%s163 + $0x3e8] sm:$0xff] %v421
        %550 = vst [vmem:[%s163 + $0x3f0] sm:$0xff] %v422
        %551 = vst [vmem:[%s163 + $0x3f8] sm:$0xff] %v423
        %s552 = sand.u32 %s75, 1
        %s553 = scalar_lea.sflag [#allocation5], %s552
        %s554 = sand.u32 %s75, 1
        %s555 = smul.addr %s554, 1024
        %s556 = scalar_lea.vmem [#allocation6], %s555
        // Predicated region
        $region33: #{tpu_custom_call.1} parent=27 // pred_check
          %p557 = pneg %p85
        $region34: #{tpu_custom_call.1} parent=27 // pred_check_branch
          %559 = sbr.rel (%p557) target = $region36
        $region35: #{tpu_custom_call.1} parent=27 // pred_region
          %s560 = smul.u32 8, %s20
          %s562 = ssub.s32 16384, 16384
          %563 = vsyncadd %s553, %s562
          %s564 = smul.addr %s560, 16
          %s565 = smul.addr %s564, 128
          %s566 = scalar_lea.hbm %s2, %s565
          %s567 = sshll.u32 %s556, 4
          %s568 = int_to_ptr.vmem [resolvable:$true] %s567
          %573 = dma.vmem_to_hbm [thread:$0]  %s568, 16384, %s566, %s553, 2048, 2048, 128
        $region36: #{tpu_custom_call.1} parent=27 // pred_fallthru
          _
      $region28: #{tpu_custom_call.1} parent=5 // pred_fallthru
        _
      %p574 = scmp.le.s32.totalorder 2, %s15
      // Predicated region
      $region37: #{tpu_custom_call.1} parent=5 // pred_check
        %p575 = pneg %p574
      $region38: #{tpu_custom_call.1} parent=5 // pred_check_branch
        %577 = sbr.rel (%p575) target = $region40
      $region39: #{tpu_custom_call.1} parent=5 // pred_region
        %s578 = ssub.s32 %s15, 2
        // Predicated region
        $region41: #{tpu_custom_call.1} parent=39 // pred_check
          %p579 = pneg %p91
        $region42: #{tpu_custom_call.1} parent=39 // pred_check_branch
          %581 = sbr.rel (%p579) target = $region44
        $region43: #{tpu_custom_call.1} parent=39 // pred_region
          %s582 = sand.u32 %s76, 1
          %s583 = scalar_lea.sflag [#allocation5], %s582
          %s584 = sand.u32 %s76, 1
          %s585 = smul.addr %s584, 1024
          %s586 = scalar_lea.vmem [#allocation6], %s585
          %587 = dma.done %s583, 16384
        $region44: #{tpu_custom_call.1} parent=39 // pred_fallthru
          _
      $region40: #{tpu_custom_call.1} parent=5 // pred_fallthru
        _
    $region6: #{tpu_custom_call.1} parent=1 // loop_footer
      %s19 = sadd.s32 1, %s15
    $region7: #{tpu_custom_call.1} parent=1 // loop_footer_branch
      %14 = sbr.rel target = $region3
    $region8: #{tpu_custom_call.1} parent=1 // loop_exit
      _
    %588 = vsyncpa [#allocation4], 1
    %s589 = scalar_lea.sflag [#allocation4], 1
    %590 = vsyncpa %s589, 1
    %591 = vsyncpa [#allocation5], 1
    %s592 = scalar_lea.sflag [#allocation5], 1
    %593 = vsyncpa %s592, 1

</llo_original>
